<compile_context>
chip_gen: v5e
topology: v5e:2x2
jax: 0.10.0
libtpu: 0.0.40
codegen_flags: <defaults>
</compile_context>

<pallas_src>
import functools

import jax
import jax.numpy as jnp
from jax.experimental import pallas as pl
from jax.experimental.pallas import tpu as pltpu


def _round_up(n: int, m: int) -> int:
    return ((n + m - 1) // m) * m


def _adv_cdan_kernel(x_ref, w1_ref, b1_ref, w2_ref, b2_ref, w3_ref, b3_ref,
                     o_ref, acc_ref, *, in_f: int, tk: int):
    k = pl.program_id(1)

    @pl.when(k == 0)
    def _():
        acc_ref[...] = jnp.zeros_like(acc_ref)

    x_blk = x_ref[...]
    w1_blk = w1_ref[...]
    if in_f % tk != 0:
        # Last K block reads past in_f: zero the out-of-range columns of x and
        # rows of W1 so (possibly NaN) garbage cannot reach the accumulator.
        rem = in_f - k * tk
        xc = jax.lax.broadcasted_iota(jnp.int32, x_blk.shape, 1)
        x_blk = jnp.where(xc < rem, x_blk, 0)
        wr = jax.lax.broadcasted_iota(jnp.int32, w1_blk.shape, 0)
        w1_blk = jnp.where(wr < rem, w1_blk, 0)

    # Layer 1 partial product: cast x to bf16 (VPU), bf16 x bf16 -> f32 on MXU.
    acc_ref[...] += jnp.dot(x_blk.astype(jnp.bfloat16), w1_blk,
                            preferred_element_type=jnp.float32)

    @pl.when(k == pl.num_programs(1) - 1)
    def _():
        # Bias + ReLU (VPU); dropout1 is identity at inference.
        h = jnp.maximum(acc_ref[...] + b1_ref[...], 0.0)

        # Layer 2 on the MXU; bias + ReLU on VPU; dropout2 identity.
        h = jnp.dot(h.astype(jnp.bfloat16), w2_ref[...],
                    preferred_element_type=jnp.float32)
        h = jnp.maximum(h + b2_ref[...], 0.0)

        # Layer 3 (H -> 1) done as w3 (1,H) contracted against h (bm,H): the
        # MXU result is already lane-dense (1, bm), so the store below is one
        # unmasked full-lane vst.
        y = jax.lax.dot_general(
            w3_ref[...].astype(jnp.bfloat16), h.astype(jnp.bfloat16),
            (((1,), (1,)), ((), ())), preferred_element_type=jnp.float32)
        y = jax.nn.sigmoid(y + b3_ref[0, 0])        # EUP exp/recip
        o_ref[...] = y.reshape(o_ref.shape).astype(o_ref.dtype)


@functools.partial(jax.jit, static_argnames=("block_m", "block_k"))
def adversarial_network_cdan(x, w1, b1, w2, b2, w3, b3, *,
                             block_m: int = 512, block_k: int = 2048):
    """x: (B, in_feature), any float dtype.  Weights stored transposed vs.
    PyTorch: w1:(in,H) bf16, w2:(H,H) bf16, w3:(1,H) f32, b1/b2:(1,H) f32,
    b3:(1,1) f32.  Returns (B, 1) float32."""
    B, in_f = x.shape
    H = w1.shape[1]

    # Batch tile: multiple of 16 (bf16 sublane packing), capped by block_m.
    bm = max(16, _round_up(min(block_m, B), 16))
    m_tiles = pl.cdiv(B, bm)

    # Layer-1 K tile: stream W1 in tk-chunks when in_feature is large.
    tk_cap = max(128, (block_k // 128) * 128)
    tk = in_f if in_f <= tk_cap else tk_cap
    k_tiles = pl.cdiv(in_f, tk)

    # VMEM budget: streamed tiles are double-buffered, resident weights are
    # single-buffered (pl.Buffered(1)), plus accumulator + temporaries.
    x_bytes = x.dtype.itemsize
    w1_bufs = 1 if k_tiles == 1 else 2
    vmem_need = (
        2 * bm * tk * x_bytes                     # x tiles (double-buffered)
        + w1_bufs * tk * H * w1.dtype.itemsize    # W1 tile(s)
        + H * H * w2.dtype.itemsize               # W2 (resident, 1 buffer)
        + 3 * 8 * max(H, 128) * 4                 # b1, b2, w3 (sublane-padded)
        + 2 * 8 * bm * 4                          # output tiles
        + bm * H * 4                              # f32 accumulator scratch
        + 4 * bm * H * 4                          # in-kernel temporaries
    )
    vmem_limit = int(min(max(vmem_need + (4 << 20), 32 << 20), 128 << 20))

    resident = pl.Buffered(1)                     # fetched once; 1 buffer
    w1_mode = pl.Buffered(1) if k_tiles == 1 else None

    kernel = functools.partial(_adv_cdan_kernel, in_f=in_f, tk=tk)

    out = pl.pallas_call(
        kernel,
        out_shape=jax.ShapeDtypeStruct((m_tiles, 1, bm), jnp.float32),
        grid=(m_tiles, k_tiles),
        in_specs=[
            pl.BlockSpec((bm, tk), lambda i, k: (i, k)),            # x
            pl.BlockSpec((tk, H), lambda i, k: (k, 0),
                         pipeline_mode=w1_mode),                    # W1
            pl.BlockSpec((1, H), lambda i, k: (0, 0),
                         pipeline_mode=resident),                   # b1
            pl.BlockSpec((H, H), lambda i, k: (0, 0),
                         pipeline_mode=resident),                   # W2
            pl.BlockSpec((1, H), lambda i, k: (0, 0),
                         pipeline_mode=resident),                   # b2
            pl.BlockSpec((1, H), lambda i, k: (0, 0),
                         pipeline_mode=resident),                   # w3
            pl.BlockSpec(memory_space=pltpu.MemorySpace.SMEM),      # b3 scalar
        ],
        out_specs=pl.BlockSpec((1, 1, bm), lambda i, k: (i, 0, 0)),
        scratch_shapes=[pltpu.VMEM((bm, H), jnp.float32)],
        compiler_params=pltpu.CompilerParams(
            dimension_semantics=("parallel", "arbitrary"),
            vmem_limit_bytes=vmem_limit,
        ),
    )(x, w1, b1, w2, b2, w3, b3)

    # Lane-dense (m_tiles, 1, bm) -> (B, 1); padded tail rows are discarded.
    return out.reshape(-1)[:B].reshape(B, 1)


def _init_params(key, in_feature, hidden_size):
    """Deterministic synthetic parameters (not a checkpoint).

    PyTorch Linear stores W as (out, in); here weights are transposed to
    (in, out) so the contracted / output features sit on the lane axis."""
    k1, k2, k3, k4, k5, k6 = jax.random.split(key, 6)
    w1 = (jax.random.normal(k1, (in_feature, hidden_size), jnp.float32) * 0.01
          ).astype(jnp.bfloat16)
    b1 = jax.random.normal(k2, (1, hidden_size), jnp.float32) * 0.01
    w2 = (jax.random.normal(k3, (hidden_size, hidden_size), jnp.float32) * 0.01
          ).astype(jnp.bfloat16)
    b2 = jax.random.normal(k4, (1, hidden_size), jnp.float32) * 0.01
    w3 = jax.random.normal(k5, (1, hidden_size), jnp.float32) * 0.01
    b3 = jax.random.normal(k6, (1, 1), jnp.float32) * 0.01
    return w1, b1, w2, b2, w3, b3


if __name__ == "__main__":
    in_feature = 256    # lane-aligned (multiple of 128)
    hidden_size = 128
    batch = 256

    key = jax.random.PRNGKey(0)
    kx, kp = jax.random.split(key)
    x = jax.random.normal(kx, (batch, in_feature), jnp.float32)
    params = _init_params(kp, in_feature, hidden_size)

    # block_m=128 -> grid (2, 1): both v7x TensorCores get a batch tile.
    y = adversarial_network_cdan(x, *params, block_m=128)
    y = jax.block_until_ready(y)

    # Plain-JAX reference mirroring the kernel's bf16 casts.
    w1, b1, w2, b2, w3, b3 = params
    f32 = jnp.float32
    xb = x.astype(jnp.bfloat16).astype(f32)
    h = jnp.maximum(xb @ w1.astype(f32) + b1, 0.0)
    h = jnp.maximum(h.astype(jnp.bfloat16).astype(f32) @ w2.astype(f32) + b2, 0.0)
    logits = (h.astype(jnp.bfloat16).astype(f32)
              @ w3.astype(jnp.bfloat16).astype(f32).T + b3[0, 0])
    ref = jax.nn.sigmoid(logits)

    assert y.shape == (batch, 1), y.shape
    err = float(jnp.max(jnp.abs(y - ref)))
    assert jnp.allclose(y, ref, atol=2e-2, rtol=2e-2), err
    print("KERNEL_OK")
</pallas_src>

<mosaic_0001>
module attributes {stable_mosaic.version = 11 : i64} {
  func.func @_adv_cdan_kernel(%arg0: i32, %arg1: i32, %arg2: memref<128x256xf32, #tpu.memory_space<vmem>>, %arg3: memref<256x128xbf16, #tpu.memory_space<vmem>>, %arg4: memref<1x128xf32, #tpu.memory_space<vmem>>, %arg5: memref<128x128xbf16, #tpu.memory_space<vmem>>, %arg6: memref<1x128xf32, #tpu.memory_space<vmem>>, %arg7: memref<1x128xf32, #tpu.memory_space<vmem>>, %arg8: memref<1x1xf32, #tpu.memory_space<smem>>, %arg9: memref<1x1x128xf32, #tpu.memory_space<vmem>>, %arg10: memref<128x128xf32, #tpu.memory_space<vmem>>) attributes {dimension_semantics = [#tpu.dimension_semantics<parallel>, #tpu.dimension_semantics<arbitrary>], iteration_bounds = array<i64: 2, 1>, scalar_prefetch = 0 : i64, scratch_operands = 1 : i64, tpu.core_type = #tpu.core_type<tc>, window_params = [{transform_indices = @transform_0, window_bounds = array<i64: 128, 256>}, {pipeline_mode = #tpu.pipeline_mode<synchronous>, transform_indices = @transform_1, window_bounds = array<i64: 256, 128>}, {pipeline_mode = #tpu.pipeline_mode<synchronous>, transform_indices = @transform_2, window_bounds = array<i64: 1, 128>}, {pipeline_mode = #tpu.pipeline_mode<synchronous>, transform_indices = @transform_3, window_bounds = array<i64: 128, 128>}, {pipeline_mode = #tpu.pipeline_mode<synchronous>, transform_indices = @transform_4, window_bounds = array<i64: 1, 128>}, {pipeline_mode = #tpu.pipeline_mode<synchronous>, transform_indices = @transform_5, window_bounds = array<i64: 1, 128>}, {transform_indices = @transform_6, window_bounds = array<i64: 1, 1>}, {transform_indices = @transform_7, window_bounds = array<i64: 1, 1, 128>}]} {
    %c0_i32 = arith.constant 0 : i32
    %0 = arith.cmpi eq, %arg1, %c0_i32 : i32
    %1 = arith.extui %0 : i1 to i32
    %c0_i32_0 = arith.constant 0 : i32
    %2 = arith.cmpi ne, %1, %c0_i32_0 : i32
    scf.if %2 {
      %cst_10 = arith.constant 0.000000e+00 : f32
      %13 = vector.broadcast %cst_10 : f32 to vector<128x128xf32>
      %c0_11 = arith.constant 0 : index
      %c0_12 = arith.constant 0 : index
      %14 = vector.load %arg10[%c0_11, %c0_12] : memref<128x128xf32, #tpu.memory_space<vmem>>, vector<128x128xf32>
      tpu.vector_store %arg10[%c0_11, %c0_12], %13 {strides = array<i32>} : memref<128x128xf32, #tpu.memory_space<vmem>>, vector<128x128xf32>,
    } else {
    }
    %c0 = arith.constant 0 : index
    %c0_1 = arith.constant 0 : index
    %3 = vector.load %arg2[%c0, %c0_1] : memref<128x256xf32, #tpu.memory_space<vmem>>, vector<128x256xf32>
    %c0_2 = arith.constant 0 : index
    %c0_3 = arith.constant 0 : index
    %4 = vector.load %arg3[%c0_2, %c0_3] : memref<256x128xbf16, #tpu.memory_space<vmem>>, vector<256x128xbf16>
    %c0_4 = arith.constant 0 : index
    %c0_5 = arith.constant 0 : index
    %5 = vector.load %arg10[%c0_4, %c0_5] : memref<128x128xf32, #tpu.memory_space<vmem>>, vector<128x128xf32>
    %6 = arith.truncf %3 : vector<128x256xf32> to vector<128x256xbf16>
    %cst = arith.constant dense<0.000000e+00> : vector<128x128xf32>
    %7 = tpu.matmul %6, %4, %cst {dimension_numbers = #tpu.dot_dimension_numbers<[1], [0], [0], [1], [0, 0, 1, 1], [], []>} : vector<128x256xbf16>, vector<256x128xbf16>, vector<128x128xf32> -> vector<128x128xf32>
    %8 = arith.addf %5, %7 : vector<128x128xf32>
    %c0_6 = arith.constant 0 : index
    %c0_7 = arith.constant 0 : index
    %9 = vector.load %arg10[%c0_6, %c0_7] : memref<128x128xf32, #tpu.memory_space<vmem>>, vector<128x128xf32>
    tpu.vector_store %arg10[%c0_6, %c0_7], %8 {strides = array<i32>} : memref<128x128xf32, #tpu.memory_space<vmem>>, vector<128x128xf32>,
    %c0_i32_8 = arith.constant 0 : i32
    %10 = arith.cmpi eq, %arg1, %c0_i32_8 : i32
    %11 = arith.extui %10 : i1 to i32
    %c0_i32_9 = arith.constant 0 : i32
    %12 = arith.cmpi ne, %11, %c0_i32_9 : i32
    scf.if %12 {
      %c0_10 = arith.constant 0 : index
      %c0_11 = arith.constant 0 : index
      %13 = vector.load %arg10[%c0_10, %c0_11] : memref<128x128xf32, #tpu.memory_space<vmem>>, vector<128x128xf32>
      %c0_12 = arith.constant 0 : index
      %c0_13 = arith.constant 0 : index
      %14 = vector.load %arg4[%c0_12, %c0_13] : memref<1x128xf32, #tpu.memory_space<vmem>>, vector<1x128xf32>
      %15 = vector.broadcast %14 : vector<1x128xf32> to vector<128x128xf32>
      %16 = arith.addf %13, %15 : vector<128x128xf32>
      %cst_14 = arith.constant 0.000000e+00 : f32
      %17 = vector.broadcast %cst_14 : f32 to vector<128x128xf32>
      %18 = arith.maximumf %16, %17 : vector<128x128xf32>
      %19 = arith.truncf %18 : vector<128x128xf32> to vector<128x128xbf16>
      %c0_15 = arith.constant 0 : index
      %c0_16 = arith.constant 0 : index
      %20 = vector.load %arg5[%c0_15, %c0_16] : memref<128x128xbf16, #tpu.memory_space<vmem>>, vector<128x128xbf16>
      %cst_17 = arith.constant dense<0.000000e+00> : vector<128x128xf32>
      %21 = tpu.matmul %19, %20, %cst_17 {dimension_numbers = #tpu.dot_dimension_numbers<[1], [0], [0], [1], [0, 0, 1, 1], [], []>} : vector<128x128xbf16>, vector<128x128xbf16>, vector<128x128xf32> -> vector<128x128xf32>
      %c0_18 = arith.constant 0 : index
      %c0_19 = arith.constant 0 : index
      %22 = vector.load %arg6[%c0_18, %c0_19] : memref<1x128xf32, #tpu.memory_space<vmem>>, vector<1x128xf32>
      %23 = vector.broadcast %22 : vector<1x128xf32> to vector<128x128xf32>
      %24 = arith.addf %21, %23 : vector<128x128xf32>
      %cst_20 = arith.constant 0.000000e+00 : f32
      %25 = vector.broadcast %cst_20 : f32 to vector<128x128xf32>
      %26 = arith.maximumf %24, %25 : vector<128x128xf32>
      %c0_21 = arith.constant 0 : index
      %c0_22 = arith.constant 0 : index
      %27 = vector.load %arg7[%c0_21, %c0_22] : memref<1x128xf32, #tpu.memory_space<vmem>>, vector<1x128xf32>
      %28 = arith.truncf %27 : vector<1x128xf32> to vector<1x128xbf16>
      %29 = arith.truncf %26 : vector<128x128xf32> to vector<128x128xbf16>
      %cst_23 = arith.constant dense<0.000000e+00> : vector<1x128xf32>
      %30 = tpu.matmul %28, %29, %cst_23 {dimension_numbers = #tpu.dot_dimension_numbers<[1], [1], [0], [0], [0, 0, 1, 0], [], []>} : vector<1x128xbf16>, vector<128x128xbf16>, vector<1x128xf32> -> vector<1x128xf32>
      %c0_24 = arith.constant 0 : index
      %c0_25 = arith.constant 0 : index
      %31 = memref.load %arg8[%c0_24, %c0_25] : memref<1x1xf32, #tpu.memory_space<smem>>
      %32 = vector.broadcast %31 : f32 to vector<1x128xf32>
      %33 = arith.addf %30, %32 : vector<1x128xf32>
      %34 = arith.negf %33 : vector<1x128xf32>
      %35 = math.exp %34 : vector<1x128xf32>
      %cst_26 = arith.constant 1.000000e+00 : f32
      %36 = vector.broadcast %cst_26 : f32 to vector<1x128xf32>
      %37 = arith.addf %36, %35 : vector<1x128xf32>
      %38 = arith.divf %36, %37 : vector<1x128xf32>
      %39 = vector.shape_cast %38 : vector<1x128xf32> to vector<1x1x128xf32>
      %c0_27 = arith.constant 0 : index
      %c0_28 = arith.constant 0 : index
      %c0_29 = arith.constant 0 : index
      %40 = vector.load %arg9[%c0_27, %c0_28, %c0_29] : memref<1x1x128xf32, #tpu.memory_space<vmem>>, vector<1x1x128xf32>
      tpu.vector_store %arg9[%c0_27, %c0_28, %c0_29], %39 {strides = array<i32>} : memref<1x1x128xf32, #tpu.memory_space<vmem>>, vector<1x1x128xf32>,
    } else {
    }
    return
  }
  func.func @transform_0(%arg0: i32, %arg1: i32) -> (i32, i32) {
    %c0_i32 = arith.constant 0 : i32
    return %arg0, %arg1 : i32, i32
  }
  func.func @transform_1(%arg0: i32, %arg1: i32) -> (i32, i32) {
    %c0_i32 = arith.constant 0 : i32
    %c0_i32_0 = arith.constant 0 : i32
    return %arg1, %c0_i32 : i32, i32
  }
  func.func @transform_2(%arg0: i32, %arg1: i32) -> (i32, i32) {
    %c0_i32 = arith.constant 0 : i32
    %c0_i32_0 = arith.constant 0 : i32
    %c0_i32_1 = arith.constant 0 : i32
    return %c0_i32, %c0_i32_0 : i32, i32
  }
  func.func @transform_3(%arg0: i32, %arg1: i32) -> (i32, i32) {
    %c0_i32 = arith.constant 0 : i32
    %c0_i32_0 = arith.constant 0 : i32
    %c0_i32_1 = arith.constant 0 : i32
    return %c0_i32, %c0_i32_0 : i32, i32
  }
  func.func @transform_4(%arg0: i32, %arg1: i32) -> (i32, i32) {
    %c0_i32 = arith.constant 0 : i32
    %c0_i32_0 = arith.constant 0 : i32
    %c0_i32_1 = arith.constant 0 : i32
    return %c0_i32, %c0_i32_0 : i32, i32
  }
  func.func @transform_5(%arg0: i32, %arg1: i32) -> (i32, i32) {
    %c0_i32 = arith.constant 0 : i32
    %c0_i32_0 = arith.constant 0 : i32
    %c0_i32_1 = arith.constant 0 : i32
    return %c0_i32, %c0_i32_0 : i32, i32
  }
  func.func @transform_6(%arg0: i32, %arg1: i32) -> (i32, i32) {
    %c0_i32 = arith.constant 0 : i32
    %c0_i32_0 = arith.constant 0 : i32
    %c0_i32_1 = arith.constant 0 : i32
    return %c0_i32, %c0_i32_0 : i32, i32
  }
  func.func @transform_7(%arg0: i32, %arg1: i32) -> (i32, i32, i32) {
    %c0_i32 = arith.constant 0 : i32
    %c0_i32_0 = arith.constant 0 : i32
    %c0_i32_1 = arith.constant 0 : i32
    return %arg0, %c0_i32, %c0_i32_0 : i32, i32, i32
  }
}

</mosaic_0001>

<llo_original>
// kernel: adversarial_network_cdan.1
$region0: #{adversarial_network_cdan.1}
  #allocation0 [shape = 'u32[]', space=smem, size = 0x4, offset = 0x4, fixed_abs, tag = 'smem constant byte address 0x4 - core index']
  #allocation1 [shape = 'u32[72,128]{1,0:T(1,128)}', space=vmem, size = 0x9000, scoped, tag = 'internal scratch']
  #allocation2 [shape = 'f32[128,128]{1,0:T(8,128)}', space=vmem, size = 0x10000, scoped, tag = 'scratch operand']
  #allocation3 [shape = 'f32[1,1]{1,0:T(1,128)S(6)}', space=smem, size = 0x200, scoped, tag = 'scoped memory for adversarial_network_cdan.1']
  %s0 = inlined_call_operand.hbm [shape: f32[256,256], index: 0, kind: input, shape index: {}]
  %s1 = inlined_call_operand.hbm [shape: bf16[256,128], index: 1, kind: input, shape index: {}]
  %s2 = inlined_call_operand.vmem [shape: f32[1,128], index: 2, kind: input, shape index: {}]
  %s3 = inlined_call_operand.hbm [shape: bf16[128,128], index: 3, kind: input, shape index: {}]
  %s4 = inlined_call_operand.vmem [shape: f32[1,128], index: 4, kind: input, shape index: {}]
  %s5 = inlined_call_operand.vmem [shape: f32[1,128], index: 5, kind: input, shape index: {}]
  %s6 = inlined_call_operand.<no memory space> [shape: f32[1,1], index: 6, kind: input, shape index: {}]
  %s7 = inlined_call_operand.hbm [shape: f32[2,1,128], index: 7, kind: output, shape index: {}]
  %s8 = sld [smem:[#allocation0]]
  $region81: #{adversarial_network_cdan.1} parent=0
    _
  %s10 = ssub.s32 1, %s8
  %s11 = scalar_select 0, %s10, %s8
  %12 = sst [smem:[#allocation3]] %s6
  $region1: #{adversarial_network_cdan.1} parent=0
    #allocation4 [shape = 'u8[262144]{0}', space=vmem, size = 0x40000, scoped, tag = 'input window, operand 0']
    #allocation5 [shape = 's32[2]{0}', space=sflag, size = 0x8, scoped, tag = 'scoped memory for adversarial_network_cdan.1']
    #allocation6 [shape = 's32[2]{0}', space=sflag, size = 0x8, scoped, tag = 'scoped memory for adversarial_network_cdan.1']
    #allocation7 [shape = 'u8[65536]{0}', space=vmem, size = 0x10000, scoped, tag = 'input window, operand 1, single buffered']
    #allocation8 [shape = 's32[1]{0}', space=sflag, size = 0x4, scoped, tag = 'scoped memory for adversarial_network_cdan.1']
    #allocation9 [shape = 'u8[32768]{0}', space=vmem, size = 0x8000, scoped, tag = 'input window, operand 3, single buffered']
    #allocation10 [shape = 'u8[1024]{0}', space=vmem, size = 0x400, scoped, tag = 'output window, operand 0']
    %13 = vsyncpa [#allocation5], 0
    %s14 = scalar_lea.sflag [#allocation5], 1
    %15 = vsyncpa %s14, 0
    %16 = vsyncpa [#allocation8], 0
    %17 = vsyncpa [#allocation6], 0
    %s18 = scalar_lea.sflag [#allocation6], 1
    %19 = vsyncpa %s18, 0
    loop: start=0, step=1, limit=4
    $region2: #{adversarial_network_cdan.1} parent=1 // loop_pre_header
      _
    $region3: #{adversarial_network_cdan.1} parent=1 // loop_header
      %s21 = sphi 0, %s25
      %p22 = scmp.ge.s32.totalorder %s21, 4
      %s28 = sphi 0, %s40
      %s29 = sphi 0, %s36
      %s30 = sphi 0, %s28
      %s31 = sphi 0, %s29
      %s32 = sphi 0, %s30
      %s33 = sphi 0, %s31
      %s45 = sphi 0, %s47
      %s48 = sphi 0, %s45
      %s49 = sphi 0, %s48
      %s65 = sphi 0, %s49
      %s71 = sphi 0, %s73
      %s74 = sphi 0, %s71
      %s75 = sphi 0, %s74
      %s91 = sphi 0, %s75
      %s95 = sphi 0, %s95
      %s97 = sphi 0, %s95
      %s98 = sphi 0, %s97
      %s112 = sphi 0, %s98
      %s116 = sphi 0, %s116
      %s118 = sphi 0, %s116
      %s119 = sphi 0, %s118
      %s133 = sphi 0, %s119
      %s137 = sphi 0, %s137
      %s139 = sphi 0, %s137
      %s140 = sphi 0, %s139
      %s154 = sphi 0, %s140
      %s158 = sphi 0, %s158
      %s160 = sphi 0, %s158
      %s161 = sphi 0, %s160
      %s175 = sphi 0, %s161
      %s179 = sphi 0, %s179
      %s181 = sphi 0, %s179
      %s182 = sphi 0, %s181
      %s196 = sphi 0, %s182
      %s202 = sphi 0, %s204
      %s205 = sphi 0, %s202
      %s206 = sphi 0, %s205
      %s222 = sphi 0, %s206
    $region4: #{adversarial_network_cdan.1} parent=1 // loop_header_branch
      %24 = sbr.rel (%p22) target = $region8
    $region5: #{adversarial_network_cdan.1} parent=1 // loop_body
      %s26 = ssub.s32 %s21, 1
      %s27 = ssub.s32 %s21, 2
      %s34 = sadd.s32 1, %s29
      %p35 = scmp.ge.s32.totalorder %s34, 1
      %s36 = scalar_select %p35, 0, %s34
      %s37 = sadd.s32 1, %s28
      %s38 = scalar_select %p35, %s37, %s28
      %p39 = scmp.ge.s32.totalorder %s38, 2
      %s40 = scalar_select %p39, 0, %s38
      %s41 = ssub.s32 %s28, %s40
      %s42 = ssub.s32 %s29, %s36
      %s43 = sor.u32 %s41, %s42
      %p44 = scmp.eq.s32.totalorder %s43, 0
      %s46 = sadd.s32 %s45, 1
      %s47 = scalar_select %p44, %s45, %s46
      %p50 = pneg %p44
      %p51 = scmp.eq.s32.totalorder %s21, 1
      %p52 = por %p50, %p51
      %p53 = scmp.ne.s32.totalorder %s45, %s48
      %p54 = scmp.eq.s32.totalorder %s21, 0
      %p55 = por %p53, %p54
      %p56 = scmp.ne.s32.totalorder %s45, %s48
      %p57 = scmp.eq.s32.totalorder %s26, 1
      %p58 = por %p56, %p57
      %p59 = scmp.ne.s32.totalorder %s48, %s49
      %p60 = scmp.eq.s32.totalorder %s26, 0
      %p61 = por %p59, %p60
      %p62 = scmp.ne.s32.totalorder %s48, %s49
      %p63 = scmp.eq.s32.totalorder %s27, 1
      %p64 = por %p62, %p63
      %p66 = scmp.ne.s32.totalorder %s49, %s65
      %p67 = scmp.eq.s32.totalorder %s27, 0
      %p68 = por %p66, %p67
      %s69 = ssub.s32 %s29, %s36
      %p70 = scmp.eq.s32.totalorder %s69, 0
      %s72 = sadd.s32 %s71, 1
      %s73 = scalar_select %p70, %s71, %s72
      %p76 = pneg %p70
      %p77 = scmp.eq.s32.totalorder %s21, 1
      %p78 = por %p76, %p77
      %p79 = scmp.ne.s32.totalorder %s71, %s74
      %p80 = scmp.eq.s32.totalorder %s21, 0
      %p81 = por %p79, %p80
      %p82 = scmp.ne.s32.totalorder %s71, %s74
      %p83 = scmp.eq.s32.totalorder %s26, 1
      %p84 = por %p82, %p83
      %p85 = scmp.ne.s32.totalorder %s74, %s75
      %p86 = scmp.eq.s32.totalorder %s26, 0
      %p87 = por %p85, %p86
      %p88 = scmp.ne.s32.totalorder %s74, %s75
      %p89 = scmp.eq.s32.totalorder %s27, 1
      %p90 = por %p88, %p89
      %p92 = scmp.ne.s32.totalorder %s75, %s91
      %p93 = scmp.eq.s32.totalorder %s27, 0
      %p94 = por %p92, %p93
      %s96 = sadd.s32 %s95, 1
      %p99 = scmp.eq.s32.totalorder %s21, 1
      %p100 = scmp.ne.s32.totalorder %s95, %s97
      %p101 = scmp.eq.s32.totalorder %s21, 0
      %p102 = por %p100, %p101
      %p103 = scmp.ne.s32.totalorder %s95, %s97
      %p104 = scmp.eq.s32.totalorder %s26, 1
      %p105 = por %p103, %p104
      %p106 = scmp.ne.s32.totalorder %s97, %s98
      %p107 = scmp.eq.s32.totalorder %s26, 0
      %p108 = por %p106, %p107
      %p109 = scmp.ne.s32.totalorder %s97, %s98
      %p110 = scmp.eq.s32.totalorder %s27, 1
      %p111 = por %p109, %p110
      %p113 = scmp.ne.s32.totalorder %s98, %s112
      %p114 = scmp.eq.s32.totalorder %s27, 0
      %p115 = por %p113, %p114
      %s117 = sadd.s32 %s116, 1
      %p120 = scmp.eq.s32.totalorder %s21, 1
      %p121 = scmp.ne.s32.totalorder %s116, %s118
      %p122 = scmp.eq.s32.totalorder %s21, 0
      %p123 = por %p121, %p122
      %p124 = scmp.ne.s32.totalorder %s116, %s118
      %p125 = scmp.eq.s32.totalorder %s26, 1
      %p126 = por %p124, %p125
      %p127 = scmp.ne.s32.totalorder %s118, %s119
      %p128 = scmp.eq.s32.totalorder %s26, 0
      %p129 = por %p127, %p128
      %p130 = scmp.ne.s32.totalorder %s118, %s119
      %p131 = scmp.eq.s32.totalorder %s27, 1
      %p132 = por %p130, %p131
      %p134 = scmp.ne.s32.totalorder %s119, %s133
      %p135 = scmp.eq.s32.totalorder %s27, 0
      %p136 = por %p134, %p135
      %s138 = sadd.s32 %s137, 1
      %p141 = scmp.eq.s32.totalorder %s21, 1
      %p142 = scmp.ne.s32.totalorder %s137, %s139
      %p143 = scmp.eq.s32.totalorder %s21, 0
      %p144 = por %p142, %p143
      %p145 = scmp.ne.s32.totalorder %s137, %s139
      %p146 = scmp.eq.s32.totalorder %s26, 1
      %p147 = por %p145, %p146
      %p148 = scmp.ne.s32.totalorder %s139, %s140
      %p149 = scmp.eq.s32.totalorder %s26, 0
      %p150 = por %p148, %p149
      %p151 = scmp.ne.s32.totalorder %s139, %s140
      %p152 = scmp.eq.s32.totalorder %s27, 1
      %p153 = por %p151, %p152
      %p155 = scmp.ne.s32.totalorder %s140, %s154
      %p156 = scmp.eq.s32.totalorder %s27, 0
      %p157 = por %p155, %p156
      %s159 = sadd.s32 %s158, 1
      %p162 = scmp.eq.s32.totalorder %s21, 1
      %p163 = scmp.ne.s32.totalorder %s158, %s160
      %p164 = scmp.eq.s32.totalorder %s21, 0
      %p165 = por %p163, %p164
      %p166 = scmp.ne.s32.totalorder %s158, %s160
      %p167 = scmp.eq.s32.totalorder %s26, 1
      %p168 = por %p166, %p167
      %p169 = scmp.ne.s32.totalorder %s160, %s161
      %p170 = scmp.eq.s32.totalorder %s26, 0
      %p171 = por %p169, %p170
      %p172 = scmp.ne.s32.totalorder %s160, %s161
      %p173 = scmp.eq.s32.totalorder %s27, 1
      %p174 = por %p172, %p173
      %p176 = scmp.ne.s32.totalorder %s161, %s175
      %p177 = scmp.eq.s32.totalorder %s27, 0
      %p178 = por %p176, %p177
      %s180 = sadd.s32 %s179, 1
      %p183 = scmp.eq.s32.totalorder %s21, 1
      %p184 = scmp.ne.s32.totalorder %s179, %s181
      %p185 = scmp.eq.s32.totalorder %s21, 0
      %p186 = por %p184, %p185
      %p187 = scmp.ne.s32.totalorder %s179, %s181
      %p188 = scmp.eq.s32.totalorder %s26, 1
      %p189 = por %p187, %p188
      %p190 = scmp.ne.s32.totalorder %s181, %s182
      %p191 = scmp.eq.s32.totalorder %s26, 0
      %p192 = por %p190, %p191
      %p193 = scmp.ne.s32.totalorder %s181, %s182
      %p194 = scmp.eq.s32.totalorder %s27, 1
      %p195 = por %p193, %p194
      %p197 = scmp.ne.s32.totalorder %s182, %s196
      %p198 = scmp.eq.s32.totalorder %s27, 0
      %p199 = por %p197, %p198
      %s200 = ssub.s32 %s28, %s40
      %p201 = scmp.eq.s32.totalorder %s200, 0
      %s203 = sadd.s32 %s202, 1
      %s204 = scalar_select %p201, %s202, %s203
      %p207 = pneg %p201
      %p208 = scmp.eq.s32.totalorder %s21, 1
      %p209 = por %p207, %p208
      %p210 = scmp.ne.s32.totalorder %s202, %s205
      %p211 = scmp.eq.s32.totalorder %s21, 0
      %p212 = por %p210, %p211
      %p213 = scmp.ne.s32.totalorder %s202, %s205
      %p214 = scmp.eq.s32.totalorder %s26, 1
      %p215 = por %p213, %p214
      %p216 = scmp.ne.s32.totalorder %s205, %s206
      %p217 = scmp.eq.s32.totalorder %s26, 0
      %p218 = por %p216, %p217
      %p219 = scmp.ne.s32.totalorder %s205, %s206
      %p220 = scmp.eq.s32.totalorder %s27, 1
      %p221 = por %p219, %p220
      %p223 = scmp.ne.s32.totalorder %s206, %s222
      %p224 = scmp.eq.s32.totalorder %s27, 0
      %p225 = por %p223, %p224
      %p226 = scmp.le.s32.totalorder 1, %s21
      %p227 = scmp.lt.s32.totalorder %s21, 3
      %p228 = pnand %p226, %p227
      %p229 = pneg %p228
      // Predicated region
      $region9: #{adversarial_network_cdan.1} parent=5 // pred_check
        _
      $region10: #{adversarial_network_cdan.1} parent=5 // pred_check_branch
        %231 = sbr.rel (%p228) target = $region12
      $region11: #{adversarial_network_cdan.1} parent=5 // pred_region
        %s232 = ssub.s32 %s21, 1
        // Predicated region
        $region13: #{adversarial_network_cdan.1} parent=11 // pred_check
          %p233 = pneg %p87
        $region14: #{adversarial_network_cdan.1} parent=11 // pred_check_branch
          %235 = sbr.rel (%p233) target = $region16
        $region15: #{adversarial_network_cdan.1} parent=11 // pred_region
          %s236 = smul.u32 32, %s31
          %238 = vsyncadd [#allocation8], 0
          %s239 = smul.addr %s236, 4
          %s240 = scalar_lea.hbm %s1, %s239
          %s241 = sshll.u32 %s240, 4
          %s242 = int_to_ptr.hbm [resolvable:$true] %s241
          %s243 = sshll.u32 [#allocation7], 4
          %s244 = int_to_ptr.vmem [resolvable:$true] %s243
          %249 = dma.hbm_to_vmem [thread:$0]  %s242, 2048, %s244, [#allocation8], 64, 64, 4
        $region16: #{adversarial_network_cdan.1} parent=11 // pred_fallthru
          _
        // Predicated region
        $region17: #{adversarial_network_cdan.1} parent=11 // pred_check
          %p250 = pneg %p108
        $region18: #{adversarial_network_cdan.1} parent=11 // pred_check_branch
          %252 = sbr.rel (%p250) target = $region20
        $region19: #{adversarial_network_cdan.1} parent=11 // pred_region
          _
        $region20: #{adversarial_network_cdan.1} parent=11 // pred_fallthru
          _
        // Predicated region
        $region21: #{adversarial_network_cdan.1} parent=11 // pred_check
          %p253 = pneg %p129
        $region22: #{adversarial_network_cdan.1} parent=11 // pred_check_branch
          %255 = sbr.rel (%p253) target = $region24
        $region23: #{adversarial_network_cdan.1} parent=11 // pred_region
          %257 = vsyncadd [#allocation8], 0
          %s258 = sshll.u32 %s3, 4
          %s259 = int_to_ptr.hbm [resolvable:$true] %s258
          %s260 = sshll.u32 [#allocation9], 4
          %s261 = int_to_ptr.vmem [resolvable:$true] %s260
          %266 = dma.hbm_to_vmem [thread:$0]  %s259, 1024, %s261, [#allocation8], 64, 64, 4
        $region24: #{adversarial_network_cdan.1} parent=11 // pred_fallthru
          _
        // Predicated region
        $region25: #{adversarial_network_cdan.1} parent=11 // pred_check
          %p267 = pneg %p150
        $region26: #{adversarial_network_cdan.1} parent=11 // pred_check_branch
          %269 = sbr.rel (%p267) target = $region28
        $region27: #{adversarial_network_cdan.1} parent=11 // pred_region
          _
        $region28: #{adversarial_network_cdan.1} parent=11 // pred_fallthru
          _
        // Predicated region
        $region29: #{adversarial_network_cdan.1} parent=11 // pred_check
          %p270 = pneg %p171
        $region30: #{adversarial_network_cdan.1} parent=11 // pred_check_branch
          %272 = sbr.rel (%p270) target = $region32
        $region31: #{adversarial_network_cdan.1} parent=11 // pred_region
          _
        $region32: #{adversarial_network_cdan.1} parent=11 // pred_fallthru
          _
        // Predicated region
        $region33: #{adversarial_network_cdan.1} parent=11 // pred_check
          %p273 = pneg %p192
        $region34: #{adversarial_network_cdan.1} parent=11 // pred_check_branch
          %275 = sbr.rel (%p273) target = $region36
        $region35: #{adversarial_network_cdan.1} parent=11 // pred_region
          _
        $region36: #{adversarial_network_cdan.1} parent=11 // pred_fallthru
          _
      $region12: #{adversarial_network_cdan.1} parent=5 // pred_fallthru
        _
      %p276 = scmp.lt.s32.totalorder %s21, 2
      // Predicated region
      $region37: #{adversarial_network_cdan.1} parent=5 // pred_check
        %p277 = pneg %p276
      $region38: #{adversarial_network_cdan.1} parent=5 // pred_check_branch
        %279 = sbr.rel (%p277) target = $region40
      $region39: #{adversarial_network_cdan.1} parent=5 // pred_region
        // Predicated region
        $region41: #{adversarial_network_cdan.1} parent=39 // pred_check
          %p280 = pneg %p55
        $region42: #{adversarial_network_cdan.1} parent=39 // pred_check_branch
          %282 = sbr.rel (%p280) target = $region44
        $region43: #{adversarial_network_cdan.1} parent=39 // pred_region
          %s283 = sand.u32 %s45, 1
          %s284 = scalar_lea.sflag [#allocation5], %s283
          %s285 = sand.u32 %s45, 1
          %s286 = smul.addr %s285, 256
          %s287 = scalar_lea.vmem [#allocation4], %s286
          %s288 = smul.u32 16, %s28
          %s289 = smul.u32 2, %s29
          %291 = vsyncadd %s284, 0
          %s292 = smul.addr %s288, 2
          %s293 = sadd.s32 %s289, %s292
          %s294 = smul.addr %s293, 8
          %s295 = scalar_lea.hbm %s0, %s294
          %s296 = sshll.u32 %s295, 4
          %s297 = int_to_ptr.hbm [resolvable:$true] %s296
          %s298 = sshll.u32 %s287, 4
          %s299 = int_to_ptr.vmem [resolvable:$true] %s298
          %304 = dma.hbm_to_vmem [thread:$0]  %s297, 4096, %s299, %s284, 256, 256, 16
        $region44: #{adversarial_network_cdan.1} parent=39 // pred_fallthru
          _
      $region40: #{adversarial_network_cdan.1} parent=5 // pred_fallthru
        _
      %p305 = scmp.le.s32.totalorder 1, %s21
      %p306 = scmp.lt.s32.totalorder %s21, 3
      %p307 = pnand %p305, %p306
      %p308 = pneg %p307
      // Predicated region
      $region45: #{adversarial_network_cdan.1} parent=5 // pred_check
        _
      $region46: #{adversarial_network_cdan.1} parent=5 // pred_check_branch
        %310 = sbr.rel (%p307) target = $region48
      $region47: #{adversarial_network_cdan.1} parent=5 // pred_region
        %s311 = ssub.s32 %s21, 1
        %s312 = sand.u32 %s48, 1
        %s313 = scalar_lea.sflag [#allocation5], %s312
        %s314 = sand.u32 %s48, 1
        %s315 = smul.addr %s314, 256
        %s316 = scalar_lea.vmem [#allocation4], %s315
        // Predicated region
        $region49: #{adversarial_network_cdan.1} parent=47 // pred_check
          %p317 = pneg %p61
        $region50: #{adversarial_network_cdan.1} parent=47 // pred_check_branch
          %319 = sbr.rel (%p317) target = $region52
        $region51: #{adversarial_network_cdan.1} parent=47 // pred_region
          %321 = dma.done %s313, 4096
        $region52: #{adversarial_network_cdan.1} parent=47 // pred_fallthru
          _
        // Predicated region
        $region53: #{adversarial_network_cdan.1} parent=47 // pred_check
          %p322 = pneg %p87
        $region54: #{adversarial_network_cdan.1} parent=47 // pred_check_branch
          %324 = sbr.rel (%p322) target = $region56
        $region55: #{adversarial_network_cdan.1} parent=47 // pred_region
          %326 = dma.done [#allocation8], 2048
        $region56: #{adversarial_network_cdan.1} parent=47 // pred_fallthru
          _
        // Predicated region
        $region57: #{adversarial_network_cdan.1} parent=47 // pred_check
          %p327 = pneg %p129
        $region58: #{adversarial_network_cdan.1} parent=47 // pred_check_branch
          %329 = sbr.rel (%p327) target = $region60
        $region59: #{adversarial_network_cdan.1} parent=47 // pred_region
          %331 = dma.done [#allocation8], 1024
        $region60: #{adversarial_network_cdan.1} parent=47 // pred_fallthru
          _
        %s332 = sand.u32 %s48, 1
        %s333 = scalar_lea.sflag [#allocation5], %s332
        %s334 = sand.u32 %s48, 1
        %s335 = smul.addr %s334, 256
        %s336 = scalar_lea.vmem [#allocation4], %s335
        %p337 = pneg %p61
        %p338 = pneg %p58
        %p339 = pneg %p87
        %p340 = pneg %p84
        %p341 = pneg %p108
        %p342 = pneg %p105
        %p343 = pneg %p129
        %p344 = pneg %p126
        %p345 = pneg %p150
        %p346 = pneg %p147
        %p347 = pneg %p171
        %p348 = pneg %p168
        %p349 = pneg %p192
        %p350 = pneg %p189
        %p351 = pneg %p218
        %p352 = pneg %p215
        %s353 = sand.u32 %s205, 1
        %s354 = scalar_lea.sflag [#allocation6], %s353
        %s355 = sand.u32 %s205, 1
        %s356 = scalar_lea.vmem [#allocation10], %s355
        %s357 = smul.u32 16, %s30
        %s358 = smul.u32 2, %s31
        %s359 = smul.u32 32, %s31
        %p360 = scmp.eq.s32.totalorder %s31, 0
        // Predicated region
        $region61: #{adversarial_network_cdan.1} parent=47 // pred_check
          %p361 = pneg %p360
        $region62: #{adversarial_network_cdan.1} parent=47 // pred_check_branch
          %363 = sbr.rel (%p361) target = $region64
        $region63: #{adversarial_network_cdan.1} parent=47 // pred_region
          %364 = vst [vmem:[#allocation2] sm:$0xff] 0.0
          %365 = vst [vmem:[#allocation2 + $0x8] sm:$0xff] 0.0
          %366 = vst [vmem:[#allocation2 + $0x10] sm:$0xff] 0.0
          %367 = vst [vmem:[#allocation2 + $0x18] sm:$0xff] 0.0
          %368 = vst [vmem:[#allocation2 + $0x20] sm:$0xff] 0.0
          %369 = vst [vmem:[#allocation2 + $0x28] sm:$0xff] 0.0
          %370 = vst [vmem:[#allocation2 + $0x30] sm:$0xff] 0.0
          %371 = vst [vmem:[#allocation2 + $0x38] sm:$0xff] 0.0
          %372 = vst [vmem:[#allocation2 + $0x40] sm:$0xff] 0.0
          %373 = vst [vmem:[#allocation2 + $0x48] sm:$0xff] 0.0
          %374 = vst [vmem:[#allocation2 + $0x50] sm:$0xff] 0.0
          %375 = vst [vmem:[#allocation2 + $0x58] sm:$0xff] 0.0
          %376 = vst [vmem:[#allocation2 + $0x60] sm:$0xff] 0.0
          %377 = vst [vmem:[#allocation2 + $0x68] sm:$0xff] 0.0
          %378 = vst [vmem:[#allocation2 + $0x70] sm:$0xff] 0.0
          %379 = vst [vmem:[#allocation2 + $0x78] sm:$0xff] 0.0
        $region64: #{adversarial_network_cdan.1} parent=47 // pred_fallthru
          _
        %v380 = vld [vmem:[%s316] sm:$0xff]
        %v381 = vld [vmem:[%s316 + $0x8] sm:$0xff]
        %v382 = vld [vmem:[%s316 + $0x10] sm:$0xff]
        %v383 = vld [vmem:[%s316 + $0x18] sm:$0xff]
        %v384 = vld [vmem:[%s316 + $0x20] sm:$0xff]
        %v385 = vld [vmem:[%s316 + $0x28] sm:$0xff]
        %v386 = vld [vmem:[%s316 + $0x30] sm:$0xff]
        %v387 = vld [vmem:[%s316 + $0x38] sm:$0xff]
        %v388 = vld [vmem:[%s316 + $0x40] sm:$0xff]
        %v389 = vld [vmem:[%s316 + $0x48] sm:$0xff]
        %v390 = vld [vmem:[%s316 + $0x50] sm:$0xff]
        %v391 = vld [vmem:[%s316 + $0x58] sm:$0xff]
        %v392 = vld [vmem:[%s316 + $0x60] sm:$0xff]
        %v393 = vld [vmem:[%s316 + $0x68] sm:$0xff]
        %v394 = vld [vmem:[%s316 + $0x70] sm:$0xff]
        %v395 = vld [vmem:[%s316 + $0x78] sm:$0xff]
        %v396 = vld [vmem:[%s316 + $0x80] sm:$0xff]
        %v397 = vld [vmem:[%s316 + $0x88] sm:$0xff]
        %v398 = vld [vmem:[%s316 + $0x90] sm:$0xff]
        %v399 = vld [vmem:[%s316 + $0x98] sm:$0xff]
        %v400 = vld [vmem:[%s316 + $0xa0] sm:$0xff]
        %v401 = vld [vmem:[%s316 + $0xa8] sm:$0xff]
        %v402 = vld [vmem:[%s316 + $0xb0] sm:$0xff]
        %v403 = vld [vmem:[%s316 + $0xb8] sm:$0xff]
        %v404 = vld [vmem:[%s316 + $0xc0] sm:$0xff]
        %v405 = vld [vmem:[%s316 + $0xc8] sm:$0xff]
        %v406 = vld [vmem:[%s316 + $0xd0] sm:$0xff]
        %v407 = vld [vmem:[%s316 + $0xd8] sm:$0xff]
        %v408 = vld [vmem:[%s316 + $0xe0] sm:$0xff]
        %v409 = vld [vmem:[%s316 + $0xe8] sm:$0xff]
        %v410 = vld [vmem:[%s316 + $0xf0] sm:$0xff]
        %v411 = vld [vmem:[%s316 + $0xf8] sm:$0xff]
        %v412 = vld [vmem:[#allocation7] sm:$0xf]
        %v413 = vld [vmem:[#allocation7 + $0x4] sm:$0xf]
        %v414 = vld [vmem:[#allocation7 + $0x8] sm:$0xf]
        %v415 = vld [vmem:[#allocation7 + $0xc] sm:$0xf]
        %v416 = vld [vmem:[#allocation7 + $0x10] sm:$0xf]
        %v417 = vld [vmem:[#allocation7 + $0x14] sm:$0xf]
        %v418 = vld [vmem:[#allocation7 + $0x18] sm:$0xf]
        %v419 = vld [vmem:[#allocation7 + $0x1c] sm:$0xf]
        %v420 = vld [vmem:[#allocation7 + $0x20] sm:$0xf]
        %v421 = vld [vmem:[#allocation7 + $0x24] sm:$0xf]
        %v422 = vld [vmem:[#allocation7 + $0x28] sm:$0xf]
        %v423 = vld [vmem:[#allocation7 + $0x2c] sm:$0xf]
        %v424 = vld [vmem:[#allocation7 + $0x30] sm:$0xf]
        %v425 = vld [vmem:[#allocation7 + $0x34] sm:$0xf]
        %v426 = vld [vmem:[#allocation7 + $0x38] sm:$0xf]
        %v427 = vld [vmem:[#allocation7 + $0x3c] sm:$0xf]
        %v428 = vld [vmem:[#allocation7 + $0x40] sm:$0xf]
        %v429 = vld [vmem:[#allocation7 + $0x44] sm:$0xf]
        %v430 = vld [vmem:[#allocation7 + $0x48] sm:$0xf]
        %v431 = vld [vmem:[#allocation7 + $0x4c] sm:$0xf]
        %v432 = vld [vmem:[#allocation7 + $0x50] sm:$0xf]
        %v433 = vld [vmem:[#allocation7 + $0x54] sm:$0xf]
        %v434 = vld [vmem:[#allocation7 + $0x58] sm:$0xf]
        %v435 = vld [vmem:[#allocation7 + $0x5c] sm:$0xf]
        %v436 = vld [vmem:[#allocation7 + $0x60] sm:$0xf]
        %v437 = vld [vmem:[#allocation7 + $0x64] sm:$0xf]
        %v438 = vld [vmem:[#allocation7 + $0x68] sm:$0xf]
        %v439 = vld [vmem:[#allocation7 + $0x6c] sm:$0xf]
        %v440 = vld [vmem:[#allocation7 + $0x70] sm:$0xf]
        %v441 = vld [vmem:[#allocation7 + $0x74] sm:$0xf]
        %v442 = vld [vmem:[#allocation7 + $0x78] sm:$0xf]
        %v443 = vld [vmem:[#allocation7 + $0x7c] sm:$0xf]
        %v444 = vld [vmem:[#allocation2] sm:$0xff]
        %v445 = vld [vmem:[#allocation2 + $0x8] sm:$0xff]
        %v446 = vld [vmem:[#allocation2 + $0x10] sm:$0xff]
        %v447 = vld [vmem:[#allocation2 + $0x18] sm:$0xff]
        %v448 = vld [vmem:[#allocation2 + $0x20] sm:$0xff]
        %v449 = vld [vmem:[#allocation2 + $0x28] sm:$0xff]
        %v450 = vld [vmem:[#allocation2 + $0x30] sm:$0xff]
        %v451 = vld [vmem:[#allocation2 + $0x38] sm:$0xff]
        %v452 = vld [vmem:[#allocation2 + $0x40] sm:$0xff]
        %v453 = vld [vmem:[#allocation2 + $0x48] sm:$0xff]
        %v454 = vld [vmem:[#allocation2 + $0x50] sm:$0xff]
        %v455 = vld [vmem:[#allocation2 + $0x58] sm:$0xff]
        %v456 = vld [vmem:[#allocation2 + $0x60] sm:$0xff]
        %v457 = vld [vmem:[#allocation2 + $0x68] sm:$0xff]
        %v458 = vld [vmem:[#allocation2 + $0x70] sm:$0xff]
        %v459 = vld [vmem:[#allocation2 + $0x78] sm:$0xff]
        %v460 = vpack.c.bf16 %v382, %v380
        %v461 = vpack.c.bf16 %v383, %v381
        %v462 = vpack.c.bf16 %v386, %v384
        %v463 = vpack.c.bf16 %v387, %v385
        %v464 = vpack.c.bf16 %v390, %v388
        %v465 = vpack.c.bf16 %v391, %v389
        %v466 = vpack.c.bf16 %v394, %v392
        %v467 = vpack.c.bf16 %v395, %v393
        %v468 = vpack.c.bf16 %v398, %v396
        %v469 = vpack.c.bf16 %v399, %v397
        %v470 = vpack.c.bf16 %v402, %v400
        %v471 = vpack.c.bf16 %v403, %v401
        %v472 = vpack.c.bf16 %v406, %v404
        %v473 = vpack.c.bf16 %v407, %v405
        %v474 = vpack.c.bf16 %v410, %v408
        %v475 = vpack.c.bf16 %v411, %v409
        %v508 = vunpack.c.l.b16 %v412
        %v509 = vunpack.c.l.b16 %v413
        %v510 = vunpack.c.l.b16 %v414
        %v511 = vunpack.c.l.b16 %v415
        %v512 = vunpack.c.l.b16 %v416
        %v513 = vunpack.c.l.b16 %v417
        %v514 = vunpack.c.l.b16 %v418
        %v515 = vunpack.c.l.b16 %v419
        %v516 = vunpack.c.l.b16 %v420
        %v517 = vunpack.c.l.b16 %v421
        %v518 = vunpack.c.l.b16 %v422
        %v519 = vunpack.c.l.b16 %v423
        %v520 = vunpack.c.l.b16 %v424
        %v521 = vunpack.c.l.b16 %v425
        %v522 = vunpack.c.l.b16 %v426
        %v523 = vunpack.c.l.b16 %v427
        %v524 = vunpack.c.l.b16 %v428
        %v525 = vunpack.c.l.b16 %v429
        %v526 = vunpack.c.l.b16 %v430
        %v527 = vunpack.c.l.b16 %v431
        %v528 = vunpack.c.l.b16 %v432
        %v529 = vunpack.c.l.b16 %v433
        %v530 = vunpack.c.l.b16 %v434
        %v531 = vunpack.c.l.b16 %v435
        %v532 = vunpack.c.l.b16 %v436
        %v533 = vunpack.c.l.b16 %v437
        %v534 = vunpack.c.l.b16 %v438
        %v535 = vunpack.c.l.b16 %v439
        %v536 = vunpack.c.l.b16 %v440
        %v537 = vunpack.c.l.b16 %v441
        %v538 = vunpack.c.l.b16 %v442
        %v539 = vunpack.c.l.b16 %v443
        %v540 = vpack.c.b16 %v509, %v508
        %v541 = vpack.c.b16 %v511, %v510
        %v542 = vpack.c.b16 %v513, %v512
        %v543 = vpack.c.b16 %v515, %v514
        %v544 = vpack.c.b16 %v517, %v516
        %v545 = vpack.c.b16 %v519, %v518
        %v546 = vpack.c.b16 %v521, %v520
        %v547 = vpack.c.b16 %v523, %v522
        %v548 = vpack.c.b16 %v525, %v524
        %v549 = vpack.c.b16 %v527, %v526
        %v550 = vpack.c.b16 %v529, %v528
        %v551 = vpack.c.b16 %v531, %v530
        %v552 = vpack.c.b16 %v533, %v532
        %v553 = vpack.c.b16 %v535, %v534
        %v554 = vpack.c.b16 %v537, %v536
        %v555 = vpack.c.b16 %v539, %v538
        %572 = vmatpush.bf16.msra.mxu0 %v547
        %573 = vmatpush.bf16.msra.mxu0 %v546
        %574 = vmatpush.bf16.msra.mxu0 %v545
        %575 = vmatpush.bf16.msra.mxu0 %v544
        %576 = vmatpush.bf16.msra.mxu0 %v543
        %577 = vmatpush.bf16.msra.mxu0 %v542
        %578 = vmatpush.bf16.msra.mxu0 %v541
        %579 = vmatpush.bf16.msra.mxu0 %v540
        %580 = vmatmul.bf16.gmra.mxu0 %v460
        %v581 = vpop.f32.mrf.mxu0
        %v582 = vadd.f32 0.0, %v581
        %v583 = vpop.f32.mrf.mxu0
        %v584 = vadd.f32 0.0, %v583
        %585 = vmatmul.bf16.gmra.mxu0 %v462
        %v586 = vpop.f32.mrf.mxu0
        %v587 = vadd.f32 0.0, %v586
        %v588 = vpop.f32.mrf.mxu0
        %v589 = vadd.f32 0.0, %v588
        %590 = vmatmul.bf16.gmra.mxu0 %v464
        %v591 = vpop.f32.mrf.mxu0
        %v592 = vadd.f32 0.0, %v591
        %v593 = vpop.f32.mrf.mxu0
        %v594 = vadd.f32 0.0, %v593
        %595 = vmatmul.bf16.gmra.mxu0 %v466
        %v596 = vpop.f32.mrf.mxu0
        %v597 = vadd.f32 0.0, %v596
        %v598 = vpop.f32.mrf.mxu0
        %v599 = vadd.f32 0.0, %v598
        %600 = vmatmul.bf16.gmra.mxu0 %v468
        %v601 = vpop.f32.mrf.mxu0
        %v602 = vadd.f32 0.0, %v601
        %v603 = vpop.f32.mrf.mxu0
        %v604 = vadd.f32 0.0, %v603
        %605 = vmatmul.bf16.gmra.mxu0 %v470
        %v606 = vpop.f32.mrf.mxu0
        %v607 = vadd.f32 0.0, %v606
        %v608 = vpop.f32.mrf.mxu0
        %v609 = vadd.f32 0.0, %v608
        %610 = vmatmul.bf16.gmra.mxu0 %v472
        %v611 = vpop.f32.mrf.mxu0
        %v612 = vadd.f32 0.0, %v611
        %v613 = vpop.f32.mrf.mxu0
        %v614 = vadd.f32 0.0, %v613
        %615 = vmatmul.bf16.gmra.mxu0 %v474
        %v616 = vpop.f32.mrf.mxu0
        %v617 = vadd.f32 0.0, %v616
        %v618 = vpop.f32.mrf.mxu0
        %v619 = vadd.f32 0.0, %v618
        %620 = vdwg.mxu0
        %621 = vmatpush.bf16.msra.mxu0 %v555
        %622 = vmatpush.bf16.msra.mxu0 %v554
        %623 = vmatpush.bf16.msra.mxu0 %v553
        %624 = vmatpush.bf16.msra.mxu0 %v552
        %625 = vmatpush.bf16.msra.mxu0 %v551
        %626 = vmatpush.bf16.msra.mxu0 %v550
        %627 = vmatpush.bf16.msra.mxu0 %v549
        %628 = vmatpush.bf16.msra.mxu0 %v548
        %629 = vmatmul.bf16.gmra.mxu0 %v461
        %v630 = vpop.f32.mrf.mxu0
        %v631 = vadd.f32 %v582, %v630
        %v632 = vpop.f32.mrf.mxu0
        %v633 = vadd.f32 %v584, %v632
        %634 = vmatmul.bf16.gmra.mxu0 %v463
        %v635 = vpop.f32.mrf.mxu0
        %v636 = vadd.f32 %v587, %v635
        %v637 = vpop.f32.mrf.mxu0
        %v638 = vadd.f32 %v589, %v637
        %639 = vmatmul.bf16.gmra.mxu0 %v465
        %v640 = vpop.f32.mrf.mxu0
        %v641 = vadd.f32 %v592, %v640
        %v642 = vpop.f32.mrf.mxu0
        %v643 = vadd.f32 %v594, %v642
        %644 = vmatmul.bf16.gmra.mxu0 %v467
        %v645 = vpop.f32.mrf.mxu0
        %v646 = vadd.f32 %v597, %v645
        %v647 = vpop.f32.mrf.mxu0
        %v648 = vadd.f32 %v599, %v647
        %649 = vmatmul.bf16.gmra.mxu0 %v469
        %v650 = vpop.f32.mrf.mxu0
        %v651 = vadd.f32 %v602, %v650
        %v652 = vpop.f32.mrf.mxu0
        %v653 = vadd.f32 %v604, %v652
        %654 = vmatmul.bf16.gmra.mxu0 %v471
        %v655 = vpop.f32.mrf.mxu0
        %v656 = vadd.f32 %v607, %v655
        %v657 = vpop.f32.mrf.mxu0
        %v658 = vadd.f32 %v609, %v657
        %659 = vmatmul.bf16.gmra.mxu0 %v473
        %v660 = vpop.f32.mrf.mxu0
        %v661 = vadd.f32 %v612, %v660
        %v662 = vpop.f32.mrf.mxu0
        %v663 = vadd.f32 %v614, %v662
        %664 = vmatmul.bf16.gmra.mxu0 %v475
        %v665 = vpop.f32.mrf.mxu0
        %v666 = vadd.f32 %v617, %v665
        %v667 = vpop.f32.mrf.mxu0
        %v668 = vadd.f32 %v619, %v667
        %669 = vdwg.mxu0
        %v670 = vadd.f32 %v444, %v631
        %v671 = vadd.f32 %v445, %v633
        %v672 = vadd.f32 %v446, %v636
        %v673 = vadd.f32 %v447, %v638
        %v674 = vadd.f32 %v448, %v641
        %v675 = vadd.f32 %v449, %v643
        %v676 = vadd.f32 %v450, %v646
        %v677 = vadd.f32 %v451, %v648
        %v678 = vadd.f32 %v452, %v651
        %v679 = vadd.f32 %v453, %v653
        %v680 = vadd.f32 %v454, %v656
        %v681 = vadd.f32 %v455, %v658
        %v682 = vadd.f32 %v456, %v661
        %v683 = vadd.f32 %v457, %v663
        %v684 = vadd.f32 %v458, %v666
        %v685 = vadd.f32 %v459, %v668
        %686 = vst [vmem:[#allocation2] sm:$0xff] %v670
        %687 = vst [vmem:[#allocation2 + $0x8] sm:$0xff] %v671
        %688 = vst [vmem:[#allocation2 + $0x10] sm:$0xff] %v672
        %689 = vst [vmem:[#allocation2 + $0x18] sm:$0xff] %v673
        %690 = vst [vmem:[#allocation2 + $0x20] sm:$0xff] %v674
        %691 = vst [vmem:[#allocation2 + $0x28] sm:$0xff] %v675
        %692 = vst [vmem:[#allocation2 + $0x30] sm:$0xff] %v676
        %693 = vst [vmem:[#allocation2 + $0x38] sm:$0xff] %v677
        %694 = vst [vmem:[#allocation2 + $0x40] sm:$0xff] %v678
        %695 = vst [vmem:[#allocation2 + $0x48] sm:$0xff] %v679
        %696 = vst [vmem:[#allocation2 + $0x50] sm:$0xff] %v680
        %697 = vst [vmem:[#allocation2 + $0x58] sm:$0xff] %v681
        %698 = vst [vmem:[#allocation2 + $0x60] sm:$0xff] %v682
        %699 = vst [vmem:[#allocation2 + $0x68] sm:$0xff] %v683
        %700 = vst [vmem:[#allocation2 + $0x70] sm:$0xff] %v684
        %701 = vst [vmem:[#allocation2 + $0x78] sm:$0xff] %v685
        // Predicated region
        $region65: #{adversarial_network_cdan.1} parent=47 // pred_check
          %p702 = pneg %p360
        $region66: #{adversarial_network_cdan.1} parent=47 // pred_check_branch
          %704 = sbr.rel (%p702) target = $region68
        $region67: #{adversarial_network_cdan.1} parent=47 // pred_region
          %v705 = vld [vmem:[#allocation2] sm:$0xff]
          %v706 = vld [vmem:[#allocation2 + $0x8] sm:$0xff]
          %v707 = vld [vmem:[#allocation2 + $0x10] sm:$0xff]
          %v708 = vld [vmem:[#allocation2 + $0x18] sm:$0xff]
          %v709 = vld [vmem:[#allocation2 + $0x20] sm:$0xff]
          %v710 = vld [vmem:[#allocation2 + $0x28] sm:$0xff]
          %v711 = vld [vmem:[#allocation2 + $0x30] sm:$0xff]
          %v712 = vld [vmem:[#allocation2 + $0x38] sm:$0xff]
          %v713 = vld [vmem:[#allocation2 + $0x40] sm:$0xff]
          %v714 = vld [vmem:[#allocation2 + $0x48] sm:$0xff]
          %v715 = vld [vmem:[#allocation2 + $0x50] sm:$0xff]
          %v716 = vld [vmem:[#allocation2 + $0x58] sm:$0xff]
          %v717 = vld [vmem:[#allocation2 + $0x60] sm:$0xff]
          %v718 = vld [vmem:[#allocation2 + $0x68] sm:$0xff]
          %v719 = vld [vmem:[#allocation2 + $0x70] sm:$0xff]
          %v720 = vld [vmem:[#allocation2 + $0x78] sm:$0xff]
          %v721 = vld [vmem:[%s2] sm:$0x1]
          %v723 = vperm.slane %v721, 0
          %v725 = vadd.f32 %v705, %v723
          %v726 = vadd.f32 %v706, %v723
          %v727 = vadd.f32 %v707, %v723
          %v728 = vadd.f32 %v708, %v723
          %v729 = vadd.f32 %v709, %v723
          %v730 = vadd.f32 %v710, %v723
          %v731 = vadd.f32 %v711, %v723
          %v732 = vadd.f32 %v712, %v723
          %v733 = vadd.f32 %v713, %v723
          %v734 = vadd.f32 %v714, %v723
          %v735 = vadd.f32 %v715, %v723
          %v736 = vadd.f32 %v716, %v723
          %v737 = vadd.f32 %v717, %v723
          %v738 = vadd.f32 %v718, %v723
          %v739 = vadd.f32 %v719, %v723
          %v740 = vadd.f32 %v720, %v723
          %v741 = vmax.f32 %v725, 0.0
          %v742 = vmax.f32 %v726, 0.0
          %v743 = vmax.f32 %v727, 0.0
          %v744 = vmax.f32 %v728, 0.0
          %v745 = vmax.f32 %v729, 0.0
          %v746 = vmax.f32 %v730, 0.0
          %v747 = vmax.f32 %v731, 0.0
          %v748 = vmax.f32 %v732, 0.0
          %v749 = vmax.f32 %v733, 0.0
          %v750 = vmax.f32 %v734, 0.0
          %v751 = vmax.f32 %v735, 0.0
          %v752 = vmax.f32 %v736, 0.0
          %v753 = vmax.f32 %v737, 0.0
          %v754 = vmax.f32 %v738, 0.0
          %v755 = vmax.f32 %v739, 0.0
          %v756 = vmax.f32 %v740, 0.0
          %v757 = vpack.c.bf16 %v742, %v741
          %v758 = vpack.c.bf16 %v744, %v743
          %v759 = vpack.c.bf16 %v746, %v745
          %v760 = vpack.c.bf16 %v748, %v747
          %v761 = vpack.c.bf16 %v750, %v749
          %v762 = vpack.c.bf16 %v752, %v751
          %v763 = vpack.c.bf16 %v754, %v753
          %v764 = vpack.c.bf16 %v756, %v755
          %v765 = vld [vmem:[#allocation9] sm:$0xf]
          %v766 = vld [vmem:[#allocation9 + $0x4] sm:$0xf]
          %v767 = vld [vmem:[#allocation9 + $0x8] sm:$0xf]
          %v768 = vld [vmem:[#allocation9 + $0xc] sm:$0xf]
          %v769 = vld [vmem:[#allocation9 + $0x10] sm:$0xf]
          %v770 = vld [vmem:[#allocation9 + $0x14] sm:$0xf]
          %v771 = vld [vmem:[#allocation9 + $0x18] sm:$0xf]
          %v772 = vld [vmem:[#allocation9 + $0x1c] sm:$0xf]
          %v773 = vld [vmem:[#allocation9 + $0x20] sm:$0xf]
          %v774 = vld [vmem:[#allocation9 + $0x24] sm:$0xf]
          %v775 = vld [vmem:[#allocation9 + $0x28] sm:$0xf]
          %v776 = vld [vmem:[#allocation9 + $0x2c] sm:$0xf]
          %v777 = vld [vmem:[#allocation9 + $0x30] sm:$0xf]
          %v778 = vld [vmem:[#allocation9 + $0x34] sm:$0xf]
          %v779 = vld [vmem:[#allocation9 + $0x38] sm:$0xf]
          %v780 = vld [vmem:[#allocation9 + $0x3c] sm:$0xf]
          %v781 = vld [vmem:[%s4] sm:$0x1]
          %v783 = vperm.slane %v781, 0
          %v801 = vunpack.c.l.b16 %v765
          %v802 = vunpack.c.l.b16 %v766
          %v803 = vunpack.c.l.b16 %v767
          %v804 = vunpack.c.l.b16 %v768
          %v805 = vunpack.c.l.b16 %v769
          %v806 = vunpack.c.l.b16 %v770
          %v807 = vunpack.c.l.b16 %v771
          %v808 = vunpack.c.l.b16 %v772
          %v809 = vunpack.c.l.b16 %v773
          %v810 = vunpack.c.l.b16 %v774
          %v811 = vunpack.c.l.b16 %v775
          %v812 = vunpack.c.l.b16 %v776
          %v813 = vunpack.c.l.b16 %v777
          %v814 = vunpack.c.l.b16 %v778
          %v815 = vunpack.c.l.b16 %v779
          %v816 = vunpack.c.l.b16 %v780
          %v817 = vpack.c.b16 %v802, %v801
          %v818 = vpack.c.b16 %v804, %v803
          %v819 = vpack.c.b16 %v806, %v805
          %v820 = vpack.c.b16 %v808, %v807
          %v821 = vpack.c.b16 %v810, %v809
          %v822 = vpack.c.b16 %v812, %v811
          %v823 = vpack.c.b16 %v814, %v813
          %v824 = vpack.c.b16 %v816, %v815
          %833 = vmatpush.bf16.msra.mxu0 %v824
          %834 = vmatpush.bf16.msra.mxu0 %v823
          %835 = vmatpush.bf16.msra.mxu0 %v822
          %836 = vmatpush.bf16.msra.mxu0 %v821
          %837 = vmatpush.bf16.msra.mxu0 %v820
          %838 = vmatpush.bf16.msra.mxu0 %v819
          %839 = vmatpush.bf16.msra.mxu0 %v818
          %840 = vmatpush.bf16.msra.mxu0 %v817
          %841 = vmatmul.bf16.gmra.mxu0 %v757
          %v842 = vpop.f32.mrf.mxu0
          %v843 = vadd.f32 %v783, %v842
          %v844 = vpop.f32.mrf.mxu0
          %v845 = vadd.f32 %v783, %v844
          %846 = vmatmul.bf16.gmra.mxu0 %v758
          %v847 = vpop.f32.mrf.mxu0
          %v848 = vadd.f32 %v783, %v847
          %v849 = vpop.f32.mrf.mxu0
          %v850 = vadd.f32 %v783, %v849
          %851 = vmatmul.bf16.gmra.mxu0 %v759
          %v852 = vpop.f32.mrf.mxu0
          %v853 = vadd.f32 %v783, %v852
          %v854 = vpop.f32.mrf.mxu0
          %v855 = vadd.f32 %v783, %v854
          %856 = vmatmul.bf16.gmra.mxu0 %v760
          %v857 = vpop.f32.mrf.mxu0
          %v858 = vadd.f32 %v783, %v857
          %v859 = vpop.f32.mrf.mxu0
          %v860 = vadd.f32 %v783, %v859
          %861 = vmatmul.bf16.gmra.mxu0 %v761
          %v862 = vpop.f32.mrf.mxu0
          %v863 = vadd.f32 %v783, %v862
          %v864 = vpop.f32.mrf.mxu0
          %v865 = vadd.f32 %v783, %v864
          %866 = vmatmul.bf16.gmra.mxu0 %v762
          %v867 = vpop.f32.mrf.mxu0
          %v868 = vadd.f32 %v783, %v867
          %v869 = vpop.f32.mrf.mxu0
          %v870 = vadd.f32 %v783, %v869
          %871 = vmatmul.bf16.gmra.mxu0 %v763
          %v872 = vpop.f32.mrf.mxu0
          %v873 = vadd.f32 %v783, %v872
          %v874 = vpop.f32.mrf.mxu0
          %v875 = vadd.f32 %v783, %v874
          %876 = vmatmul.bf16.gmra.mxu0 %v764
          %v877 = vpop.f32.mrf.mxu0
          %v878 = vadd.f32 %v783, %v877
          %v879 = vpop.f32.mrf.mxu0
          %v880 = vadd.f32 %v783, %v879
          %881 = vdwg.mxu0
          %v882 = vmax.f32 %v843, 0.0
          %v883 = vmax.f32 %v845, 0.0
          %v884 = vmax.f32 %v848, 0.0
          %v885 = vmax.f32 %v850, 0.0
          %v886 = vmax.f32 %v853, 0.0
          %v887 = vmax.f32 %v855, 0.0
          %v888 = vmax.f32 %v858, 0.0
          %v889 = vmax.f32 %v860, 0.0
          %v890 = vmax.f32 %v863, 0.0
          %v891 = vmax.f32 %v865, 0.0
          %v892 = vmax.f32 %v868, 0.0
          %v893 = vmax.f32 %v870, 0.0
          %v894 = vmax.f32 %v873, 0.0
          %v895 = vmax.f32 %v875, 0.0
          %v896 = vmax.f32 %v878, 0.0
          %v897 = vmax.f32 %v880, 0.0
          %v898 = vld [vmem:[%s5] sm:$0x1]
          %v899 = vpack.c.bf16 %v898, %v898
          %v900 = vpack.c.bf16 %v883, %v882
          %v901 = vpack.c.bf16 %v885, %v884
          %v902 = vpack.c.bf16 %v887, %v886
          %v903 = vpack.c.bf16 %v889, %v888
          %v904 = vpack.c.bf16 %v891, %v890
          %v905 = vpack.c.bf16 %v893, %v892
          %v906 = vpack.c.bf16 %v895, %v894
          %v907 = vpack.c.bf16 %v897, %v896
          %s908 = sld [smem:[#allocation3]]
          %v909 = vstv %s908
          %910 = vmatpush.bf16.xpose.msra.mxu0 %v907
          %911 = vmatpush.bf16.xpose.msra.mxu0 %v906
          %912 = vmatpush.bf16.xpose.msra.mxu0 %v905
          %913 = vmatpush.bf16.xpose.msra.mxu0 %v904
          %914 = vmatpush.bf16.xpose.msra.mxu0 %v903
          %915 = vmatpush.bf16.xpose.msra.mxu0 %v902
          %916 = vmatpush.bf16.xpose.msra.mxu0 %v901
          %917 = vmatpush.bf16.xpose.msra.mxu0 %v900
          %918 = vmatmul.bf16.gmra.mxu0 %v899
          %v919 = vpop.f32.mrf.mxu0
          %v920 = vadd.f32 %v909, %v919
          %v921 = vpop.f32.mrf.mxu0
          %922 = vdwg.mxu0
          %v923 = vxor.u32 %v920, 2147483648
          %v924 = vmul.f32 %v923, 1.442695
          %v925 = vpow.pop %v924
          %v926 = vadd.f32 %v925, 1.0
          %v927 = vrcp.pop %v926
          %v928 = vmul.f32 %v926, %v927
          %v929 = vsub.f32 1.0, %v928
          %v930 = vmul.f32 %v927, %v929
          %v931 = vadd.f32 %v927, %v930
          %vm932 = vweird.f32 %v926
          %vm933 = vweird.f32 %v927
          %vm934 = vmor %vm932, %vm933
          %v935 = vsel %vm934, %v927, %v931
          %v936 = vand.u32 2147483647, %v926
          %vm937 = vcmp.eq.f32.partialorder %v936, 8.507059e+37
          %v938 = vand.u32 %v926, 2147483648
          %v939 = vor.u32 1.1754944e-38, %v938
          %v940 = vsel %vm937, %v939, %v935
          %v941 = vmul.f32 1.0, %v940
          %942 = vst [vmem:[%s356] sm:$0x1] %v941
        $region68: #{adversarial_network_cdan.1} parent=47 // pred_fallthru
          _
        %s943 = sand.u32 %s205, 1
        %s944 = scalar_lea.sflag [#allocation6], %s943
        %s945 = sand.u32 %s205, 1
        %s946 = scalar_lea.vmem [#allocation10], %s945
        // Predicated region
        $region69: #{adversarial_network_cdan.1} parent=47 // pred_check
          %p947 = pneg %p215
        $region70: #{adversarial_network_cdan.1} parent=47 // pred_check_branch
          %949 = sbr.rel (%p947) target = $region72
        $region71: #{adversarial_network_cdan.1} parent=47 // pred_region
          %951 = vsyncadd %s944, 0
          %s952 = scalar_lea.hbm %s7, %s30
          %s954 = sshll.u32 %s946, 4
          %s955 = int_to_ptr.vmem [resolvable:$true] %s954
          %s956 = sshll.u32 %s952, 4
          %s957 = int_to_ptr.hbm [resolvable:$true] %s956
          %959 = dma.vmem_to_hbm [thread:$0]  %s955, 16, %s957, %s944
        $region72: #{adversarial_network_cdan.1} parent=47 // pred_fallthru
          _
      $region48: #{adversarial_network_cdan.1} parent=5 // pred_fallthru
        _
      %p960 = scmp.le.s32.totalorder 2, %s21
      // Predicated region
      $region73: #{adversarial_network_cdan.1} parent=5 // pred_check
        %p961 = pneg %p960
      $region74: #{adversarial_network_cdan.1} parent=5 // pred_check_branch
        %963 = sbr.rel (%p961) target = $region76
      $region75: #{adversarial_network_cdan.1} parent=5 // pred_region
        %s964 = ssub.s32 %s21, 2
        // Predicated region
        $region77: #{adversarial_network_cdan.1} parent=75 // pred_check
          %p965 = pneg %p221
        $region78: #{adversarial_network_cdan.1} parent=75 // pred_check_branch
          %967 = sbr.rel (%p965) target = $region80
        $region79: #{adversarial_network_cdan.1} parent=75 // pred_region
          %s968 = sand.u32 %s206, 1
          %s969 = scalar_lea.sflag [#allocation6], %s968
          %s970 = sand.u32 %s206, 1
          %s971 = scalar_lea.vmem [#allocation10], %s970
          %973 = dma.done %s969, 16
        $region80: #{adversarial_network_cdan.1} parent=75 // pred_fallthru
          _
      $region76: #{adversarial_network_cdan.1} parent=5 // pred_fallthru
        _
    $region6: #{adversarial_network_cdan.1} parent=1 // loop_footer
      %s25 = sadd.s32 1, %s21
    $region7: #{adversarial_network_cdan.1} parent=1 // loop_footer_branch
      %20 = sbr.rel target = $region3
    $region8: #{adversarial_network_cdan.1} parent=1 // loop_exit
      _
    %974 = vsyncpa [#allocation5], 1
    %s975 = scalar_lea.sflag [#allocation5], 1
    %976 = vsyncpa %s975, 1
    %977 = vsyncpa [#allocation8], 1
    %978 = vsyncpa [#allocation6], 1
    %s979 = scalar_lea.sflag [#allocation6], 1
    %980 = vsyncpa %s979, 1

</llo_original>
